<compile_context>
chip_gen: v7x
topology: tpu7x:2x2x1
jax: 0.10.0
libtpu: 0.0.40
codegen_flags: <defaults>
</compile_context>

<pallas_src>
import jax
import jax.numpy as jnp
from jax.experimental import pallas as pl
from jax.experimental.pallas import tpu as pltpu


def _round_up(x, m):
    return (x + m - 1) // m * m


def mlp_kernel(x_ref, t_ref, w1x_ref, w1t_ref, b1_ref, w2_ref, b2_ref,
               w3_ref, b3_ref, o_ref):
    cdt = w1x_ref.dtype  # MXU compute dtype (bf16 by default, f32 optional)

    # fc1 with the torch.cat fused in:  h1 = x @ W1[:D] + t * W1[D] + b1
    x = x_ref[...].astype(cdt)
    t = t_ref[...]                                            # (TILE_B, 1) f32
    h1 = jnp.dot(x, w1x_ref[...], preferred_element_type=jnp.float32)
    h1 = h1 + t * w1t_ref[...]                                # rank-1 "t column" (VPU, f32)
    h1 = jnp.maximum(h1 + b1_ref[...], 0.0)

    # fc2 + ReLU
    h2 = jnp.dot(h1.astype(cdt), w2_ref[...], preferred_element_type=jnp.float32)
    h2 = jnp.maximum(h2 + b2_ref[...], 0.0)

    # fc3 (no activation) -> unpadded (TILE_B, D) output (masked store, no HBM waste)
    y = jnp.dot(h2.astype(cdt), w3_ref[...], preferred_element_type=jnp.float32)
    o_ref[...] = (y + b3_ref[...]).astype(o_ref.dtype)


def _choose_batch_tile(batch, tile_b):
    """Pick (TILE_B, grid_steps). Keeps the ragged last tile small and gives
    v7x's two TensorCores >=2 grid steps once the batch is big enough."""
    n_tiles = pl.cdiv(batch, tile_b)
    if n_tiles < 2 and batch >= 512:
        n_tiles = 2
    if n_tiles <= 1:
        return batch, 1                      # full-batch block (always a legal block shape)
    per = pl.cdiv(batch, n_tiles)
    t256 = _round_up(per, 256)               # MXU-friendly on v6e/v7x (and fine on v5e)
    t8 = _round_up(per, 8)
    tile = t256 if n_tiles * t256 - batch <= max(batch // 16, 8) else t8
    return tile, pl.cdiv(batch, tile)


def mlp_forward(x_input, t, params, *, tile_b=2048, compute_dtype=jnp.bfloat16):
    """x_input: (B, D) f32, t: (B, 1) f32 -> (B, D) f32.

    params = (w1, b1, w2, b2, w3, b3) with w_k shaped (in, out) (transpose of
    torch.nn.Linear.weight) and b_k shaped (1, out).
    """
    w1, b1, w2, b2, w3, b3 = params
    B, D = x_input.shape
    H = w1.shape[1]
    assert w1.shape[0] == D + 1 and w2.shape == (H, H) and w3.shape == (H, D)
    assert t.shape == (B, 1)

    cdt = jnp.dtype(compute_dtype)
    Hp = _round_up(H, 128)                   # lane-dense hidden width (internal only)

    # --- one-time zero-padding / cast of the (tiny) parameters, outside the kernel.
    # Padded hidden units have zero weight and zero bias, so (with ReLU) they stay
    # exactly zero and do not perturb the result. Output features are NOT padded.
    w1x = jnp.zeros((D, Hp), cdt).at[:, :H].set(w1[:D].astype(cdt))
    w1t = jnp.zeros((1, Hp), jnp.float32).at[:, :H].set(w1[D:D + 1].astype(jnp.float32))
    b1p = jnp.zeros((1, Hp), jnp.float32).at[:, :H].set(b1.astype(jnp.float32))
    w2p = jnp.zeros((Hp, Hp), cdt).at[:H, :H].set(w2.astype(cdt))
    b2p = jnp.zeros((1, Hp), jnp.float32).at[:, :H].set(b2.astype(jnp.float32))
    w3p = jnp.zeros((Hp, D), cdt).at[:H, :].set(w3.astype(cdt))
    b3p = b3.astype(jnp.float32).reshape(1, D)

    TILE_B, steps = _choose_batch_tile(B, tile_b)
    grid = (steps,)

    # --- scheduler hints.
    param_bytes = (w1x.size * w1x.dtype.itemsize
                   + w2p.size * w2p.dtype.itemsize
                   + w3p.size * w3p.dtype.itemsize
                   + (w1t.size + b1p.size + b2p.size + b3p.size) * 4)
    flops = 2 * B * (D * Hp + Hp * Hp + Hp * D)
    bytes_accessed = B * (D + 1) * 4 + param_bytes + B * D * 4

    # --- VMEM budget: streamed x/t/out tiles are double-buffered, weights are
    # (requested) single-buffered, plus f32 temporaries for h1/h2. Cap the scoped
    # limit at 80% of the physical VMEM of this generation (64 MiB/TC on v7x).
    vmem_est = (param_bytes
                + 2 * (TILE_B * (D + 1) * 4 + TILE_B * D * 4)
                + 2 * TILE_B * Hp * 4)
    try:
        vmem_cap = pltpu.get_tpu_info().vmem_capacity_bytes
    except Exception:
        vmem_cap = 64 * 1024 * 1024          # assume the smallest (v7x) if query fails
    vmem_limit = int(min(max(2 * vmem_est + (4 << 20), 32 << 20), int(0.8 * vmem_cap)))

    def _run(single_buffer_weights):
        if single_buffer_weights:
            # Constant index_map already avoids re-DMA; Buffered(1) also halves
            # the weights' VMEM footprint (matters under v7x's 64 MiB budget).
            ws = lambda shape: pl.BlockSpec(shape, lambda i: (0, 0),
                                            pipeline_mode=pl.Buffered(1))
        else:
            ws = lambda shape: pl.BlockSpec(shape, lambda i: (0, 0))
        return pl.pallas_call(
            mlp_kernel,
            out_shape=jax.ShapeDtypeStruct((B, D), x_input.dtype),
            grid=grid,
            in_specs=[
                pl.BlockSpec((TILE_B, D), lambda i: (i, 0)),   # x tile (streamed)
                pl.BlockSpec((TILE_B, 1), lambda i: (i, 0)),   # t tile (streamed)
                ws((D, Hp)),                                   # W1[:D]   (resident)
                ws((1, Hp)),                                   # W1[D] "t column" (f32)
                ws((1, Hp)),                                   # b1
                ws((Hp, Hp)),                                  # W2
                ws((1, Hp)),                                   # b2
                ws((Hp, D)),                                   # W3 (output dim unpadded)
                ws((1, D)),                                    # b3
            ],
            out_specs=pl.BlockSpec((TILE_B, D), lambda i: (i, 0)),
            compiler_params=pltpu.CompilerParams(
                dimension_semantics=("parallel",),
                vmem_limit_bytes=vmem_limit),
            cost_estimate=pl.CostEstimate(
                flops=flops, transcendentals=0, bytes_accessed=bytes_accessed),
        )(x_input, t, w1x, w1t, b1p, w2p, b2p, w3p, b3p)

    try:
        return _run(single_buffer_weights=True)
    except Exception:
        # Fallback if this JAX build rejects pl.Buffered(1) on pallas_call specs.
        return _run(single_buffer_weights=False)


def init_params(key, input_dim, hidden_num):
    """Deterministic synthetic init. Weights are (in, out); biases are (1, out)."""
    k1, k2, k3, k4, k5, k6 = jax.random.split(key, 6)
    w1 = jax.random.normal(k1, (input_dim + 1, hidden_num), jnp.float32) * 0.1
    b1 = jax.random.normal(k2, (1, hidden_num), jnp.float32) * 0.1
    w2 = jax.random.normal(k3, (hidden_num, hidden_num), jnp.float32) * 0.1
    b2 = jax.random.normal(k4, (1, hidden_num), jnp.float32) * 0.1
    w3 = jax.random.normal(k5, (hidden_num, input_dim), jnp.float32) * 0.1
    b3 = jax.random.normal(k6, (1, input_dim), jnp.float32) * 0.1
    return (w1, b1, w2, b2, w3, b3)


def mlp_reference(x_input, t, params):
    w1, b1, w2, b2, w3, b3 = params
    x = jnp.concatenate([x_input, t], axis=1)
    h1 = jnp.maximum(x @ w1 + b1, 0.0)
    h2 = jnp.maximum(h1 @ w2 + b2, 0.0)
    return h2 @ w3 + b3


if __name__ == "__main__":
    input_dim = 2     # typical 2-D flow-matching toy problem
    hidden_num = 32
    batch = 8

    key = jax.random.PRNGKey(0)
    kx, kt, kp = jax.random.split(key, 3)
    x_input = jax.random.normal(kx, (batch, input_dim), jnp.float32)
    t = jax.random.uniform(kt, (batch, 1), jnp.float32)
    params = init_params(kp, input_dim, hidden_num)

    y_ref = mlp_reference(x_input, t, params)

    # f32 MXU path: tight correctness check.
    y_f32 = jax.block_until_ready(
        mlp_forward(x_input, t, params, compute_dtype=jnp.float32))
    assert y_f32.shape == (batch, input_dim)
    assert jnp.allclose(y_f32, y_ref, atol=1e-5, rtol=1e-5)

    # Default bf16 MXU path (native on v5e/v6e/v7x): looser tolerance.
    y_bf16 = jax.block_until_ready(mlp_forward(x_input, t, params))
    assert y_bf16.shape == (batch, input_dim)
    assert jnp.allclose(y_bf16, y_ref, atol=2e-2, rtol=2e-2)

    print("KERNEL_OK")
</pallas_src>

<mosaic_0001>
module attributes {stable_mosaic.version = 11 : i64} {
  func.func @mlp_kernel(%arg0: i32, %arg1: memref<8x2xf32, #tpu.memory_space<vmem>>, %arg2: memref<8x1xf32, #tpu.memory_space<vmem>>, %arg3: memref<2x128xf32, #tpu.memory_space<vmem>>, %arg4: memref<1x128xf32, #tpu.memory_space<vmem>>, %arg5: memref<1x128xf32, #tpu.memory_space<vmem>>, %arg6: memref<128x128xf32, #tpu.memory_space<vmem>>, %arg7: memref<1x128xf32, #tpu.memory_space<vmem>>, %arg8: memref<128x2xf32, #tpu.memory_space<vmem>>, %arg9: memref<1x2xf32, #tpu.memory_space<vmem>>, %arg10: memref<8x2xf32, #tpu.memory_space<vmem>>) attributes {dimension_semantics = [#tpu.dimension_semantics<parallel>], iteration_bounds = array<i64: 1>, scalar_prefetch = 0 : i64, scratch_operands = 0 : i64, tpu.core_type = #tpu.core_type<tc>, window_params = [{transform_indices = @transform_0, window_bounds = array<i64: 8, 2>}, {transform_indices = @transform_1, window_bounds = array<i64: 8, 1>}, {pipeline_mode = #tpu.pipeline_mode<synchronous>, transform_indices = @transform_2, window_bounds = array<i64: 2, 128>}, {pipeline_mode = #tpu.pipeline_mode<synchronous>, transform_indices = @transform_3, window_bounds = array<i64: 1, 128>}, {pipeline_mode = #tpu.pipeline_mode<synchronous>, transform_indices = @transform_4, window_bounds = array<i64: 1, 128>}, {pipeline_mode = #tpu.pipeline_mode<synchronous>, transform_indices = @transform_5, window_bounds = array<i64: 128, 128>}, {pipeline_mode = #tpu.pipeline_mode<synchronous>, transform_indices = @transform_6, window_bounds = array<i64: 1, 128>}, {pipeline_mode = #tpu.pipeline_mode<synchronous>, transform_indices = @transform_7, window_bounds = array<i64: 128, 2>}, {pipeline_mode = #tpu.pipeline_mode<synchronous>, transform_indices = @transform_8, window_bounds = array<i64: 1, 2>}, {transform_indices = @transform_9, window_bounds = array<i64: 8, 2>}]} {
    %c0 = arith.constant 0 : index
    %c0_0 = arith.constant 0 : index
    %0 = vector.load %arg1[%c0, %c0_0] : memref<8x2xf32, #tpu.memory_space<vmem>>, vector<8x2xf32>
    %c0_1 = arith.constant 0 : index
    %c0_2 = arith.constant 0 : index
    %1 = vector.load %arg2[%c0_1, %c0_2] : memref<8x1xf32, #tpu.memory_space<vmem>>, vector<8x1xf32>
    %c0_3 = arith.constant 0 : index
    %c0_4 = arith.constant 0 : index
    %2 = vector.load %arg3[%c0_3, %c0_4] : memref<2x128xf32, #tpu.memory_space<vmem>>, vector<2x128xf32>
    %cst = arith.constant dense<0.000000e+00> : vector<8x128xf32>
    %3 = tpu.matmul %0, %2, %cst {dimension_numbers = #tpu.dot_dimension_numbers<[1], [0], [0], [1], [0, 0, 1, 1], [], []>} : vector<8x2xf32>, vector<2x128xf32>, vector<8x128xf32> -> vector<8x128xf32>
    %c0_5 = arith.constant 0 : index
    %c0_6 = arith.constant 0 : index
    %4 = vector.load %arg4[%c0_5, %c0_6] : memref<1x128xf32, #tpu.memory_space<vmem>>, vector<1x128xf32>
    %5 = vector.broadcast %1 : vector<8x1xf32> to vector<8x128xf32>
    %6 = vector.broadcast %4 : vector<1x128xf32> to vector<8x128xf32>
    %7 = arith.mulf %5, %6 : vector<8x128xf32>
    %8 = arith.addf %3, %7 : vector<8x128xf32>
    %c0_7 = arith.constant 0 : index
    %c0_8 = arith.constant 0 : index
    %9 = vector.load %arg5[%c0_7, %c0_8] : memref<1x128xf32, #tpu.memory_space<vmem>>, vector<1x128xf32>
    %10 = vector.broadcast %9 : vector<1x128xf32> to vector<8x128xf32>
    %11 = arith.addf %8, %10 : vector<8x128xf32>
    %cst_9 = arith.constant 0.000000e+00 : f32
    %12 = vector.broadcast %cst_9 : f32 to vector<8x128xf32>
    %13 = arith.maximumf %11, %12 : vector<8x128xf32>
    %c0_10 = arith.constant 0 : index
    %c0_11 = arith.constant 0 : index
    %14 = vector.load %arg6[%c0_10, %c0_11] : memref<128x128xf32, #tpu.memory_space<vmem>>, vector<128x128xf32>
    %cst_12 = arith.constant dense<0.000000e+00> : vector<8x128xf32>
    %15 = tpu.matmul %13, %14, %cst_12 {dimension_numbers = #tpu.dot_dimension_numbers<[1], [0], [0], [1], [0, 0, 1, 1], [], []>} : vector<8x128xf32>, vector<128x128xf32>, vector<8x128xf32> -> vector<8x128xf32>
    %c0_13 = arith.constant 0 : index
    %c0_14 = arith.constant 0 : index
    %16 = vector.load %arg7[%c0_13, %c0_14] : memref<1x128xf32, #tpu.memory_space<vmem>>, vector<1x128xf32>
    %17 = vector.broadcast %16 : vector<1x128xf32> to vector<8x128xf32>
    %18 = arith.addf %15, %17 : vector<8x128xf32>
    %cst_15 = arith.constant 0.000000e+00 : f32
    %19 = vector.broadcast %cst_15 : f32 to vector<8x128xf32>
    %20 = arith.maximumf %18, %19 : vector<8x128xf32>
    %c0_16 = arith.constant 0 : index
    %c0_17 = arith.constant 0 : index
    %21 = vector.load %arg8[%c0_16, %c0_17] : memref<128x2xf32, #tpu.memory_space<vmem>>, vector<128x2xf32>
    %cst_18 = arith.constant dense<0.000000e+00> : vector<8x2xf32>
    %22 = tpu.matmul %20, %21, %cst_18 {dimension_numbers = #tpu.dot_dimension_numbers<[1], [0], [0], [1], [0, 0, 1, 1], [], []>} : vector<8x128xf32>, vector<128x2xf32>, vector<8x2xf32> -> vector<8x2xf32>
    %c0_19 = arith.constant 0 : index
    %c0_20 = arith.constant 0 : index
    %23 = vector.load %arg9[%c0_19, %c0_20] : memref<1x2xf32, #tpu.memory_space<vmem>>, vector<1x2xf32>
    %24 = vector.broadcast %23 : vector<1x2xf32> to vector<8x2xf32>
    %25 = arith.addf %22, %24 : vector<8x2xf32>
    %c0_21 = arith.constant 0 : index
    %c0_22 = arith.constant 0 : index
    %26 = vector.load %arg10[%c0_21, %c0_22] : memref<8x2xf32, #tpu.memory_space<vmem>>, vector<8x2xf32>
    tpu.vector_store %arg10[%c0_21, %c0_22], %25 {strides = array<i32>} : memref<8x2xf32, #tpu.memory_space<vmem>>, vector<8x2xf32>,
    return
  }
  func.func @transform_0(%arg0: i32) -> (i32, i32) {
    %c0_i32 = arith.constant 0 : i32
    %c0_i32_0 = arith.constant 0 : i32
    return %arg0, %c0_i32 : i32, i32
  }
  func.func @transform_1(%arg0: i32) -> (i32, i32) {
    %c0_i32 = arith.constant 0 : i32
    %c0_i32_0 = arith.constant 0 : i32
    return %arg0, %c0_i32 : i32, i32
  }
  func.func @transform_2(%arg0: i32) -> (i32, i32) {
    %c0_i32 = arith.constant 0 : i32
    %c0_i32_0 = arith.constant 0 : i32
    %c0_i32_1 = arith.constant 0 : i32
    return %c0_i32, %c0_i32_0 : i32, i32
  }
  func.func @transform_3(%arg0: i32) -> (i32, i32) {
    %c0_i32 = arith.constant 0 : i32
    %c0_i32_0 = arith.constant 0 : i32
    %c0_i32_1 = arith.constant 0 : i32
    return %c0_i32, %c0_i32_0 : i32, i32
  }
  func.func @transform_4(%arg0: i32) -> (i32, i32) {
    %c0_i32 = arith.constant 0 : i32
    %c0_i32_0 = arith.constant 0 : i32
    %c0_i32_1 = arith.constant 0 : i32
    return %c0_i32, %c0_i32_0 : i32, i32
  }
  func.func @transform_5(%arg0: i32) -> (i32, i32) {
    %c0_i32 = arith.constant 0 : i32
    %c0_i32_0 = arith.constant 0 : i32
    %c0_i32_1 = arith.constant 0 : i32
    return %c0_i32, %c0_i32_0 : i32, i32
  }
  func.func @transform_6(%arg0: i32) -> (i32, i32) {
    %c0_i32 = arith.constant 0 : i32
    %c0_i32_0 = arith.constant 0 : i32
    %c0_i32_1 = arith.constant 0 : i32
    return %c0_i32, %c0_i32_0 : i32, i32
  }
  func.func @transform_7(%arg0: i32) -> (i32, i32) {
    %c0_i32 = arith.constant 0 : i32
    %c0_i32_0 = arith.constant 0 : i32
    %c0_i32_1 = arith.constant 0 : i32
    return %c0_i32, %c0_i32_0 : i32, i32
  }
  func.func @transform_8(%arg0: i32) -> (i32, i32) {
    %c0_i32 = arith.constant 0 : i32
    %c0_i32_0 = arith.constant 0 : i32
    %c0_i32_1 = arith.constant 0 : i32
    return %c0_i32, %c0_i32_0 : i32, i32
  }
  func.func @transform_9(%arg0: i32) -> (i32, i32) {
    %c0_i32 = arith.constant 0 : i32
    %c0_i32_0 = arith.constant 0 : i32
    return %arg0, %c0_i32 : i32, i32
  }
}

module attributes {stable_mosaic.version = 11 : i64} {
  func.func @mlp_kernel(%arg0: i32, %arg1: memref<8x2xf32, #tpu.memory_space<vmem>>, %arg2: memref<8x1xf32, #tpu.memory_space<vmem>>, %arg3: memref<2x128xf32, #tpu.memory_space<vmem>>, %arg4: memref<1x128xf32, #tpu.memory_space<vmem>>, %arg5: memref<1x128xf32, #tpu.memory_space<vmem>>, %arg6: memref<128x128xf32, #tpu.memory_space<vmem>>, %arg7: memref<1x128xf32, #tpu.memory_space<vmem>>, %arg8: memref<128x2xf32, #tpu.memory_space<vmem>>, %arg9: memref<1x2xf32, #tpu.memory_space<vmem>>, %arg10: memref<8x2xf32, #tpu.memory_space<vmem>>) attributes {dimension_semantics = [#tpu.dimension_semantics<parallel>], iteration_bounds = array<i64: 1>, scalar_prefetch = 0 : i64, scratch_operands = 0 : i64, tpu.core_type = #tpu.core_type<tc>, window_params = [{transform_indices = @transform_0, window_bounds = array<i64: 8, 2>}, {transform_indices = @transform_1, window_bounds = array<i64: 8, 1>}, {pipeline_mode = #tpu.pipeline_mode<synchronous>, transform_indices = @transform_2, window_bounds = array<i64: 2, 128>}, {pipeline_mode = #tpu.pipeline_mode<synchronous>, transform_indices = @transform_3, window_bounds = array<i64: 1, 128>}, {pipeline_mode = #tpu.pipeline_mode<synchronous>, transform_indices = @transform_4, window_bounds = array<i64: 1, 128>}, {pipeline_mode = #tpu.pipeline_mode<synchronous>, transform_indices = @transform_5, window_bounds = array<i64: 128, 128>}, {pipeline_mode = #tpu.pipeline_mode<synchronous>, transform_indices = @transform_6, window_bounds = array<i64: 1, 128>}, {pipeline_mode = #tpu.pipeline_mode<synchronous>, transform_indices = @transform_7, window_bounds = array<i64: 128, 2>}, {pipeline_mode = #tpu.pipeline_mode<synchronous>, transform_indices = @transform_8, window_bounds = array<i64: 1, 2>}, {transform_indices = @transform_9, window_bounds = array<i64: 8, 2>}]} {
    %c0 = arith.constant 0 : index
    %c0_0 = arith.constant 0 : index
    %0 = vector.load %arg1[%c0, %c0_0] : memref<8x2xf32, #tpu.memory_space<vmem>>, vector<8x2xf32>
    %c0_1 = arith.constant 0 : index
    %c0_2 = arith.constant 0 : index
    %1 = vector.load %arg2[%c0_1, %c0_2] : memref<8x1xf32, #tpu.memory_space<vmem>>, vector<8x1xf32>
    %c0_3 = arith.constant 0 : index
    %c0_4 = arith.constant 0 : index
    %2 = vector.load %arg3[%c0_3, %c0_4] : memref<2x128xf32, #tpu.memory_space<vmem>>, vector<2x128xf32>
    %cst = arith.constant dense<0.000000e+00> : vector<8x128xf32>
    %3 = tpu.matmul %0, %2, %cst {dimension_numbers = #tpu.dot_dimension_numbers<[1], [0], [0], [1], [0, 0, 1, 1], [], []>} : vector<8x2xf32>, vector<2x128xf32>, vector<8x128xf32> -> vector<8x128xf32>
    %c0_5 = arith.constant 0 : index
    %c0_6 = arith.constant 0 : index
    %4 = vector.load %arg4[%c0_5, %c0_6] : memref<1x128xf32, #tpu.memory_space<vmem>>, vector<1x128xf32>
    %5 = vector.broadcast %1 : vector<8x1xf32> to vector<8x128xf32>
    %6 = vector.broadcast %4 : vector<1x128xf32> to vector<8x128xf32>
    %7 = arith.mulf %5, %6 : vector<8x128xf32>
    %8 = arith.addf %3, %7 : vector<8x128xf32>
    %c0_7 = arith.constant 0 : index
    %c0_8 = arith.constant 0 : index
    %9 = vector.load %arg5[%c0_7, %c0_8] : memref<1x128xf32, #tpu.memory_space<vmem>>, vector<1x128xf32>
    %10 = vector.broadcast %9 : vector<1x128xf32> to vector<8x128xf32>
    %11 = arith.addf %8, %10 : vector<8x128xf32>
    %cst_9 = arith.constant 0.000000e+00 : f32
    %12 = vector.broadcast %cst_9 : f32 to vector<8x128xf32>
    %13 = arith.maximumf %11, %12 : vector<8x128xf32>
    %c0_10 = arith.constant 0 : index
    %c0_11 = arith.constant 0 : index
    %14 = vector.load %arg6[%c0_10, %c0_11] : memref<128x128xf32, #tpu.memory_space<vmem>>, vector<128x128xf32>
    %cst_12 = arith.constant dense<0.000000e+00> : vector<8x128xf32>
    %15 = tpu.matmul %13, %14, %cst_12 {dimension_numbers = #tpu.dot_dimension_numbers<[1], [0], [0], [1], [0, 0, 1, 1], [], []>} : vector<8x128xf32>, vector<128x128xf32>, vector<8x128xf32> -> vector<8x128xf32>
    %c0_13 = arith.constant 0 : index
    %c0_14 = arith.constant 0 : index
    %16 = vector.load %arg7[%c0_13, %c0_14] : memref<1x128xf32, #tpu.memory_space<vmem>>, vector<1x128xf32>
    %17 = vector.broadcast %16 : vector<1x128xf32> to vector<8x128xf32>
    %18 = arith.addf %15, %17 : vector<8x128xf32>
    %cst_15 = arith.constant 0.000000e+00 : f32
    %19 = vector.broadcast %cst_15 : f32 to vector<8x128xf32>
    %20 = arith.maximumf %18, %19 : vector<8x128xf32>
    %c0_16 = arith.constant 0 : index
    %c0_17 = arith.constant 0 : index
    %21 = vector.load %arg8[%c0_16, %c0_17] : memref<128x2xf32, #tpu.memory_space<vmem>>, vector<128x2xf32>
    %cst_18 = arith.constant dense<0.000000e+00> : vector<8x2xf32>
    %22 = tpu.matmul %20, %21, %cst_18 {dimension_numbers = #tpu.dot_dimension_numbers<[1], [0], [0], [1], [0, 0, 1, 1], [], []>} : vector<8x128xf32>, vector<128x2xf32>, vector<8x2xf32> -> vector<8x2xf32>
    %c0_19 = arith.constant 0 : index
    %c0_20 = arith.constant 0 : index
    %23 = vector.load %arg9[%c0_19, %c0_20] : memref<1x2xf32, #tpu.memory_space<vmem>>, vector<1x2xf32>
    %24 = vector.broadcast %23 : vector<1x2xf32> to vector<8x2xf32>
    %25 = arith.addf %22, %24 : vector<8x2xf32>
    %c0_21 = arith.constant 0 : index
    %c0_22 = arith.constant 0 : index
    %26 = vector.load %arg10[%c0_21, %c0_22] : memref<8x2xf32, #tpu.memory_space<vmem>>, vector<8x2xf32>
    tpu.vector_store %arg10[%c0_21, %c0_22], %25 {strides = array<i32>} : memref<8x2xf32, #tpu.memory_space<vmem>>, vector<8x2xf32>,
    return
  }
  func.func @transform_0(%arg0: i32) -> (i32, i32) {
    %c0_i32 = arith.constant 0 : i32
    %c0_i32_0 = arith.constant 0 : i32
    return %arg0, %c0_i32 : i32, i32
  }
  func.func @transform_1(%arg0: i32) -> (i32, i32) {
    %c0_i32 = arith.constant 0 : i32
    %c0_i32_0 = arith.constant 0 : i32
    return %arg0, %c0_i32 : i32, i32
  }
  func.func @transform_2(%arg0: i32) -> (i32, i32) {
    %c0_i32 = arith.constant 0 : i32
    %c0_i32_0 = arith.constant 0 : i32
    %c0_i32_1 = arith.constant 0 : i32
    return %c0_i32, %c0_i32_0 : i32, i32
  }
  func.func @transform_3(%arg0: i32) -> (i32, i32) {
    %c0_i32 = arith.constant 0 : i32
    %c0_i32_0 = arith.constant 0 : i32
    %c0_i32_1 = arith.constant 0 : i32
    return %c0_i32, %c0_i32_0 : i32, i32
  }
  func.func @transform_4(%arg0: i32) -> (i32, i32) {
    %c0_i32 = arith.constant 0 : i32
    %c0_i32_0 = arith.constant 0 : i32
    %c0_i32_1 = arith.constant 0 : i32
    return %c0_i32, %c0_i32_0 : i32, i32
  }
  func.func @transform_5(%arg0: i32) -> (i32, i32) {
    %c0_i32 = arith.constant 0 : i32
    %c0_i32_0 = arith.constant 0 : i32
    %c0_i32_1 = arith.constant 0 : i32
    return %c0_i32, %c0_i32_0 : i32, i32
  }
  func.func @transform_6(%arg0: i32) -> (i32, i32) {
    %c0_i32 = arith.constant 0 : i32
    %c0_i32_0 = arith.constant 0 : i32
    %c0_i32_1 = arith.constant 0 : i32
    return %c0_i32, %c0_i32_0 : i32, i32
  }
  func.func @transform_7(%arg0: i32) -> (i32, i32) {
    %c0_i32 = arith.constant 0 : i32
    %c0_i32_0 = arith.constant 0 : i32
    %c0_i32_1 = arith.constant 0 : i32
    return %c0_i32, %c0_i32_0 : i32, i32
  }
  func.func @transform_8(%arg0: i32) -> (i32, i32) {
    %c0_i32 = arith.constant 0 : i32
    %c0_i32_0 = arith.constant 0 : i32
    %c0_i32_1 = arith.constant 0 : i32
    return %c0_i32, %c0_i32_0 : i32, i32
  }
  func.func @transform_9(%arg0: i32) -> (i32, i32) {
    %c0_i32 = arith.constant 0 : i32
    %c0_i32_0 = arith.constant 0 : i32
    return %arg0, %c0_i32 : i32, i32
  }
}

</mosaic_0001>

<llo_original>
// kernel: tpu_custom_call.1
$region0: #{tpu_custom_call.1}
  #allocation0 [shape = 'u32[]', space=smem, size = 0x4, offset = 0x4, fixed_abs, tag = 'smem constant byte address 0x4 - core index']
  #allocation1 [shape = 'u32[144,128]{1,0:T(1,128)}', space=vmem, size = 0x12000, scoped, tag = 'internal scratch']
  %s0 = inlined_call_operand.vmem [shape: f32[8,2], index: 0, kind: input, shape index: {}]
  %s1 = inlined_call_operand.vmem [shape: f32[8,1], index: 1, kind: input, shape index: {}]
  %s2 = inlined_call_operand.vmem [shape: f32[2,128], index: 2, kind: input, shape index: {}]
  %s3 = inlined_call_operand.vmem [shape: f32[1,128], index: 3, kind: input, shape index: {}]
  %s4 = inlined_call_operand.vmem [shape: f32[1,128], index: 4, kind: input, shape index: {}]
  %s5 = inlined_call_operand.vmem [shape: f32[128,128], index: 5, kind: input, shape index: {}]
  %s6 = inlined_call_operand.vmem [shape: f32[1,128], index: 6, kind: input, shape index: {}]
  %s7 = inlined_call_operand.vmem [shape: f32[128,2], index: 7, kind: input, shape index: {}]
  %s8 = inlined_call_operand.vmem [shape: f32[1,2], index: 8, kind: input, shape index: {}]
  %s9 = inlined_call_operand.vmem [shape: f32[8,2], index: 9, kind: output, shape index: {}]
  %s10 = sld [smem:[#allocation0]]
  $region46: #{tpu_custom_call.1} parent=0
    _
  %s12 = ssub.s32 1, %s10
  %s13 = scalar_select 0, %s12, %s10
  // Predicated region
  $region2: #{tpu_custom_call.1} parent=0 // pred_check
    _
  $region3: #{tpu_custom_call.1} parent=0 // pred_check_branch
    %15 = sbr.rel (0) target = $region5
  $region4: #{tpu_custom_call.1} parent=0 // pred_region
    _
  $region5: #{tpu_custom_call.1} parent=0 // pred_fallthru
    _
  // Predicated region
  $region6: #{tpu_custom_call.1} parent=0 // pred_check
    _
  $region7: #{tpu_custom_call.1} parent=0 // pred_check_branch
    %17 = sbr.rel (0) target = $region9
  $region8: #{tpu_custom_call.1} parent=0 // pred_region
    _
  $region9: #{tpu_custom_call.1} parent=0 // pred_fallthru
    _
  // Predicated region
  $region10: #{tpu_custom_call.1} parent=0 // pred_check
    _
  $region11: #{tpu_custom_call.1} parent=0 // pred_check_branch
    %19 = sbr.rel (0) target = $region13
  $region12: #{tpu_custom_call.1} parent=0 // pred_region
    _
  $region13: #{tpu_custom_call.1} parent=0 // pred_fallthru
    _
  // Predicated region
  $region14: #{tpu_custom_call.1} parent=0 // pred_check
    _
  $region15: #{tpu_custom_call.1} parent=0 // pred_check_branch
    %21 = sbr.rel (0) target = $region17
  $region16: #{tpu_custom_call.1} parent=0 // pred_region
    _
  $region17: #{tpu_custom_call.1} parent=0 // pred_fallthru
    _
  // Predicated region
  $region18: #{tpu_custom_call.1} parent=0 // pred_check
    _
  $region19: #{tpu_custom_call.1} parent=0 // pred_check_branch
    %23 = sbr.rel (0) target = $region21
  $region20: #{tpu_custom_call.1} parent=0 // pred_region
    _
  $region21: #{tpu_custom_call.1} parent=0 // pred_fallthru
    _
  // Predicated region
  $region22: #{tpu_custom_call.1} parent=0 // pred_check
    _
  $region23: #{tpu_custom_call.1} parent=0 // pred_check_branch
    %25 = sbr.rel (0) target = $region25
  $region24: #{tpu_custom_call.1} parent=0 // pred_region
    _
  $region25: #{tpu_custom_call.1} parent=0 // pred_fallthru
    _
  // Predicated region
  $region26: #{tpu_custom_call.1} parent=0 // pred_check
    _
  $region27: #{tpu_custom_call.1} parent=0 // pred_check_branch
    %27 = sbr.rel (0) target = $region29
  $region28: #{tpu_custom_call.1} parent=0 // pred_region
    _
  $region29: #{tpu_custom_call.1} parent=0 // pred_fallthru
    _
  // Predicated region
  $region30: #{tpu_custom_call.1} parent=0 // pred_check
    _
  $region31: #{tpu_custom_call.1} parent=0 // pred_check_branch
    %29 = sbr.rel (0) target = $region33
  $region32: #{tpu_custom_call.1} parent=0 // pred_region
    _
  $region33: #{tpu_custom_call.1} parent=0 // pred_fallthru
    _
  // Predicated region
  $region34: #{tpu_custom_call.1} parent=0 // pred_check
    _
  $region35: #{tpu_custom_call.1} parent=0 // pred_check_branch
    %31 = sbr.rel (0) target = $region37
  $region36: #{tpu_custom_call.1} parent=0 // pred_region
    _
  $region37: #{tpu_custom_call.1} parent=0 // pred_fallthru
    _
  %v32 = vld [vmem:[%s0] sm:$0xff]
  %v33 = vld [vmem:[%s1] sm:$0xff]
  %v34 = vld [vmem:[%s2] sm:$0x3]
  %v35 = vld [vmem:[%s3] sm:$0x1]
  %37 = vset.pattern.permute.xlu0 0
  %38 = vperm.xlu0 %37, %v33
  %v39 = vpop.permute.xlu0 %38
  %v42 = vlaneseq
  %v43 = vshrl.u32 %v42, 7
  %v44 = vsub.s32 0, %v43
  %v45 = vrot.slane %v35, %v44
  %v47 = vmul.f32 %v39, %v45
  %vm48 = vcmask 15360
  %v50 = vsel %vm48, %v32, 0
  %vm52 = vcmask 1041408
  %v54 = vsel %vm52, %v34, 0
  %56 = vmatprep.subr.mxu0 0.0
  %57 = vmatpush1.msra.mxu0 %v54
  %58 = vmatprep.subr.mxu0 0.0
  %59 = vmatpush1.msra.mxu0 0.0
  %60 = vmatprep.subr.mxu0 0.0
  %61 = vmatpush1.msra.mxu0 0.0
  %62 = vmatprep.subr.mxu0 0.0
  %63 = vmatpush1.msra.mxu0 0.0
  %64 = vmatprep.subr.mxu0 0.0
  %65 = vmatpush1.msra.mxu0 0.0
  %66 = vmatprep.subr.mxu0 0.0
  %67 = vmatpush1.msra.mxu0 0.0
  %68 = vmatprep.subr.mxu0 0.0
  %69 = vmatpush1.msra.mxu0 0.0
  %70 = vmatprep.subr.mxu0 0.0
  %71 = vmatpush1.msra.mxu0 0.0
  %72 = vmatprep.subr.mxu0 0.0
  %73 = vmatpush1.msra.mxu0 0.0
  %74 = vmatprep.subr.mxu0 0.0
  %75 = vmatpush1.msra.mxu0 0.0
  %76 = vmatprep.subr.mxu0 0.0
  %77 = vmatpush1.msra.mxu0 0.0
  %78 = vmatprep.subr.mxu0 0.0
  %79 = vmatpush1.msra.mxu0 0.0
  %80 = vmatprep.subr.mxu0 0.0
  %81 = vmatpush1.msra.mxu0 0.0
  %82 = vmatprep.subr.mxu0 0.0
  %83 = vmatpush1.msra.mxu0 0.0
  %84 = vmatprep.subr.mxu0 0.0
  %85 = vmatpush1.msra.mxu0 0.0
  %86 = vmatprep.subr.mxu0 0.0
  %87 = vmatpush1.msra.mxu0 0.0
  %88 = vmatprep.subr.mxu0 0.0
  %89 = vmatpush1.msra.mxu0 0.0
  %90 = vmatprep.subr.mxu0 0.0
  %91 = vmatpush1.msra.mxu0 0.0
  %92 = vmatprep.subr.mxu0 0.0
  %93 = vmatpush1.msra.mxu0 0.0
  %94 = vmatprep.subr.mxu0 0.0
  %95 = vmatpush1.msra.mxu0 0.0
  %96 = vmatprep.subr.mxu0 0.0
  %97 = vmatpush1.msra.mxu0 0.0
  %98 = vmatprep.subr.mxu0 0.0
  %99 = vmatpush1.msra.mxu0 0.0
  %100 = vmatprep.subr.mxu0 0.0
  %101 = vmatpush1.msra.mxu0 0.0
  %102 = vmatprep.subr.mxu0 0.0
  %103 = vmatpush1.msra.mxu0 0.0
  %104 = vmatprep.subr.mxu0 0.0
  %105 = vmatpush1.msra.mxu0 0.0
  %106 = vmatprep.subr.mxu0 0.0
  %107 = vmatpush1.msra.mxu0 0.0
  %108 = vmatprep.subr.mxu0 0.0
  %109 = vmatpush1.msra.mxu0 0.0
  %110 = vmatprep.subr.mxu0 0.0
  %111 = vmatpush1.msra.mxu0 0.0
  %112 = vmatprep.subr.mxu0 0.0
  %113 = vmatpush1.msra.mxu0 0.0
  %114 = vmatprep.subr.mxu0 0.0
  %115 = vmatpush1.msra.mxu0 0.0
  %116 = vmatprep.subr.mxu0 0.0
  %117 = vmatpush1.msra.mxu0 0.0
  %118 = vmatprep.subr.mxu0 0.0
  %119 = vmatpush1.msra.mxu0 0.0
  %120 = vmatprep.mubr.f32.mxu0 0.0
  %121 = vmatmul.mubr.f32.gmra.mrb[0].mxu0 %v50
  %v122 = vpop.f32.mrb[0].mxu0
  %v123 = vadd.f32 %v47, %v122
  %v124 = vpop.f32.mrb[0].mxu0
  %125 = vdwg.mxu0
  %v126 = vld [vmem:[%s4] sm:$0x1]
  %v128 = vlaneseq
  %v129 = vshrl.u32 %v128, 7
  %v130 = vsub.s32 0, %v129
  %v131 = vrot.slane %v126, %v130
  %v133 = vadd.f32 %v123, %v131
  %v134 = vmax.f32 %v133, 0.0
  %v135 = vld [vmem:[%s5] sm:$0xff]
  %v136 = vld [vmem:[%s5 + $0x8] sm:$0xff]
  %v137 = vld [vmem:[%s5 + $0x10] sm:$0xff]
  %v138 = vld [vmem:[%s5 + $0x18] sm:$0xff]
  %v139 = vld [vmem:[%s5 + $0x20] sm:$0xff]
  %v140 = vld [vmem:[%s5 + $0x28] sm:$0xff]
  %v141 = vld [vmem:[%s5 + $0x30] sm:$0xff]
  %v142 = vld [vmem:[%s5 + $0x38] sm:$0xff]
  %v143 = vld [vmem:[%s5 + $0x40] sm:$0xff]
  %v144 = vld [vmem:[%s5 + $0x48] sm:$0xff]
  %v145 = vld [vmem:[%s5 + $0x50] sm:$0xff]
  %v146 = vld [vmem:[%s5 + $0x58] sm:$0xff]
  %v147 = vld [vmem:[%s5 + $0x60] sm:$0xff]
  %v148 = vld [vmem:[%s5 + $0x68] sm:$0xff]
  %v149 = vld [vmem:[%s5 + $0x70] sm:$0xff]
  %v150 = vld [vmem:[%s5 + $0x78] sm:$0xff]
  %v151 = vld [vmem:[%s6] sm:$0x1]
  %v153 = vlaneseq
  %v154 = vshrl.u32 %v153, 7
  %v155 = vsub.s32 0, %v154
  %v156 = vrot.slane %v151, %v155
  %158 = vmatprep.subr.mxu0 0.0
  %159 = vmatpush1.msra.mxu0 %v135
  %160 = vmatprep.subr.mxu0 0.0
  %161 = vmatpush1.msra.mxu0 %v136
  %162 = vmatprep.subr.mxu0 0.0
  %163 = vmatpush1.msra.mxu0 %v137
  %164 = vmatprep.subr.mxu0 0.0
  %165 = vmatpush1.msra.mxu0 %v138
  %166 = vmatprep.subr.mxu0 0.0
  %167 = vmatpush1.msra.mxu0 %v139
  %168 = vmatprep.subr.mxu0 0.0
  %169 = vmatpush1.msra.mxu0 %v140
  %170 = vmatprep.subr.mxu0 0.0
  %171 = vmatpush1.msra.mxu0 %v141
  %172 = vmatprep.subr.mxu0 0.0
  %173 = vmatpush1.msra.mxu0 %v142
  %174 = vmatprep.subr.mxu0 0.0
  %175 = vmatpush1.msra.mxu0 %v143
  %176 = vmatprep.subr.mxu0 0.0
  %177 = vmatpush1.msra.mxu0 %v144
  %178 = vmatprep.subr.mxu0 0.0
  %179 = vmatpush1.msra.mxu0 %v145
  %180 = vmatprep.subr.mxu0 0.0
  %181 = vmatpush1.msra.mxu0 %v146
  %182 = vmatprep.subr.mxu0 0.0
  %183 = vmatpush1.msra.mxu0 %v147
  %184 = vmatprep.subr.mxu0 0.0
  %185 = vmatpush1.msra.mxu0 %v148
  %186 = vmatprep.subr.mxu0 0.0
  %187 = vmatpush1.msra.mxu0 %v149
  %188 = vmatprep.subr.mxu0 0.0
  %189 = vmatpush1.msra.mxu0 %v150
  %190 = vmatprep.subr.mxu0 0.0
  %191 = vmatpush1.msra.mxu0 0.0
  %192 = vmatprep.subr.mxu0 0.0
  %193 = vmatpush1.msra.mxu0 0.0
  %194 = vmatprep.subr.mxu0 0.0
  %195 = vmatpush1.msra.mxu0 0.0
  %196 = vmatprep.subr.mxu0 0.0
  %197 = vmatpush1.msra.mxu0 0.0
  %198 = vmatprep.subr.mxu0 0.0
  %199 = vmatpush1.msra.mxu0 0.0
  %200 = vmatprep.subr.mxu0 0.0
  %201 = vmatpush1.msra.mxu0 0.0
  %202 = vmatprep.subr.mxu0 0.0
  %203 = vmatpush1.msra.mxu0 0.0
  %204 = vmatprep.subr.mxu0 0.0
  %205 = vmatpush1.msra.mxu0 0.0
  %206 = vmatprep.subr.mxu0 0.0
  %207 = vmatpush1.msra.mxu0 0.0
  %208 = vmatprep.subr.mxu0 0.0
  %209 = vmatpush1.msra.mxu0 0.0
  %210 = vmatprep.subr.mxu0 0.0
  %211 = vmatpush1.msra.mxu0 0.0
  %212 = vmatprep.subr.mxu0 0.0
  %213 = vmatpush1.msra.mxu0 0.0
  %214 = vmatprep.subr.mxu0 0.0
  %215 = vmatpush1.msra.mxu0 0.0
  %216 = vmatprep.subr.mxu0 0.0
  %217 = vmatpush1.msra.mxu0 0.0
  %218 = vmatprep.subr.mxu0 0.0
  %219 = vmatpush1.msra.mxu0 0.0
  %220 = vmatprep.subr.mxu0 0.0
  %221 = vmatpush1.msra.mxu0 0.0
  %222 = vmatprep.mubr.f32.mxu0 0.0
  %223 = vmatmul.mubr.f32.gmra.mrb[0].mxu0 %v134
  %v224 = vpop.f32.mrb[0].mxu0
  %v225 = vadd.f32 %v156, %v224
  %v226 = vpop.f32.mrb[0].mxu0
  %227 = vdwg.mxu0
  %v228 = vmax.f32 %v225, 0.0
  %v229 = vld [vmem:[%s7] sm:$0xff]
  %v230 = vld [vmem:[%s7 + $0x8] sm:$0xff]
  %v231 = vld [vmem:[%s7 + $0x10] sm:$0xff]
  %v232 = vld [vmem:[%s7 + $0x18] sm:$0xff]
  %v233 = vld [vmem:[%s7 + $0x20] sm:$0xff]
  %v234 = vld [vmem:[%s7 + $0x28] sm:$0xff]
  %v235 = vld [vmem:[%s7 + $0x30] sm:$0xff]
  %v236 = vld [vmem:[%s7 + $0x38] sm:$0xff]
  %v237 = vld [vmem:[%s7 + $0x40] sm:$0xff]
  %v238 = vld [vmem:[%s7 + $0x48] sm:$0xff]
  %v239 = vld [vmem:[%s7 + $0x50] sm:$0xff]
  %v240 = vld [vmem:[%s7 + $0x58] sm:$0xff]
  %v241 = vld [vmem:[%s7 + $0x60] sm:$0xff]
  %v242 = vld [vmem:[%s7 + $0x68] sm:$0xff]
  %v243 = vld [vmem:[%s7 + $0x70] sm:$0xff]
  %v244 = vld [vmem:[%s7 + $0x78] sm:$0xff]
  %v245 = vld [vmem:[%s8] sm:$0x1]
  %v247 = vlaneseq
  %v248 = vshrl.u32 %v247, 7
  %v249 = vsub.s32 0, %v248
  %v250 = vrot.slane %v245, %v249
  %252 = vmatprep.subr.mxu0 0.0
  %253 = vmatpush1.msra.mxu0 %v229
  %254 = vmatprep.subr.mxu0 0.0
  %255 = vmatpush1.msra.mxu0 %v230
  %256 = vmatprep.subr.mxu0 0.0
  %257 = vmatpush1.msra.mxu0 %v231
  %258 = vmatprep.subr.mxu0 0.0
  %259 = vmatpush1.msra.mxu0 %v232
  %260 = vmatprep.subr.mxu0 0.0
  %261 = vmatpush1.msra.mxu0 %v233
  %262 = vmatprep.subr.mxu0 0.0
  %263 = vmatpush1.msra.mxu0 %v234
  %264 = vmatprep.subr.mxu0 0.0
  %265 = vmatpush1.msra.mxu0 %v235
  %266 = vmatprep.subr.mxu0 0.0
  %267 = vmatpush1.msra.mxu0 %v236
  %268 = vmatprep.subr.mxu0 0.0
  %269 = vmatpush1.msra.mxu0 %v237
  %270 = vmatprep.subr.mxu0 0.0
  %271 = vmatpush1.msra.mxu0 %v238
  %272 = vmatprep.subr.mxu0 0.0
  %273 = vmatpush1.msra.mxu0 %v239
  %274 = vmatprep.subr.mxu0 0.0
  %275 = vmatpush1.msra.mxu0 %v240
  %276 = vmatprep.subr.mxu0 0.0
  %277 = vmatpush1.msra.mxu0 %v241
  %278 = vmatprep.subr.mxu0 0.0
  %279 = vmatpush1.msra.mxu0 %v242
  %280 = vmatprep.subr.mxu0 0.0
  %281 = vmatpush1.msra.mxu0 %v243
  %282 = vmatprep.subr.mxu0 0.0
  %283 = vmatpush1.msra.mxu0 %v244
  %284 = vmatprep.subr.mxu0 0.0
  %285 = vmatpush1.msra.mxu0 0.0
  %286 = vmatprep.subr.mxu0 0.0
  %287 = vmatpush1.msra.mxu0 0.0
  %288 = vmatprep.subr.mxu0 0.0
  %289 = vmatpush1.msra.mxu0 0.0
  %290 = vmatprep.subr.mxu0 0.0
  %291 = vmatpush1.msra.mxu0 0.0
  %292 = vmatprep.subr.mxu0 0.0
  %293 = vmatpush1.msra.mxu0 0.0
  %294 = vmatprep.subr.mxu0 0.0
  %295 = vmatpush1.msra.mxu0 0.0
  %296 = vmatprep.subr.mxu0 0.0
  %297 = vmatpush1.msra.mxu0 0.0
  %298 = vmatprep.subr.mxu0 0.0
  %299 = vmatpush1.msra.mxu0 0.0
  %300 = vmatprep.subr.mxu0 0.0
  %301 = vmatpush1.msra.mxu0 0.0
  %302 = vmatprep.subr.mxu0 0.0
  %303 = vmatpush1.msra.mxu0 0.0
  %304 = vmatprep.subr.mxu0 0.0
  %305 = vmatpush1.msra.mxu0 0.0
  %306 = vmatprep.subr.mxu0 0.0
  %307 = vmatpush1.msra.mxu0 0.0
  %308 = vmatprep.subr.mxu0 0.0
  %309 = vmatpush1.msra.mxu0 0.0
  %310 = vmatprep.subr.mxu0 0.0
  %311 = vmatpush1.msra.mxu0 0.0
  %312 = vmatprep.subr.mxu0 0.0
  %313 = vmatpush1.msra.mxu0 0.0
  %314 = vmatprep.subr.mxu0 0.0
  %315 = vmatpush1.msra.mxu0 0.0
  %316 = vmatprep.mubr.f32.mxu0 0.0
  %317 = vmatmul.mubr.f32.gmra.mrb[0].mxu0 %v228
  %v318 = vpop.f32.mrb[0].mxu0
  %v319 = vadd.f32 %v250, %v318
  %v320 = vpop.f32.mrb[0].mxu0
  %321 = vdwg.mxu0
  %322 = vst.msk [vmem:[%s9] sm:$0xff] %vm48, %v319
  // Predicated region
  $region38: #{tpu_custom_call.1} parent=0 // pred_check
    _
  $region39: #{tpu_custom_call.1} parent=0 // pred_check_branch
    %324 = sbr.rel (0) target = $region41
  $region40: #{tpu_custom_call.1} parent=0 // pred_region
    _
  $region41: #{tpu_custom_call.1} parent=0 // pred_fallthru
    _
  // Predicated region
  $region42: #{tpu_custom_call.1} parent=0 // pred_check
    _
  $region43: #{tpu_custom_call.1} parent=0 // pred_check_branch
    %326 = sbr.rel (0) target = $region45
  $region44: #{tpu_custom_call.1} parent=0 // pred_region
    _
  $region45: #{tpu_custom_call.1} parent=0 // pred_fallthru
    _

// kernel: tpu_custom_call.1
$region0: #{tpu_custom_call.1}
  #allocation0 [shape = 'u32[]', space=smem, size = 0x4, offset = 0x4, fixed_abs, tag = 'smem constant byte address 0x4 - core index']
  #allocation1 [shape = 'u32[144,128]{1,0:T(1,128)}', space=vmem, size = 0x12000, scoped, tag = 'internal scratch']
  %s0 = inlined_call_operand.vmem [shape: f32[8,2], index: 0, kind: input, shape index: {}]
  %s1 = inlined_call_operand.vmem [shape: f32[8,1], index: 1, kind: input, shape index: {}]
  %s2 = inlined_call_operand.vmem [shape: f32[2,128], index: 2, kind: input, shape index: {}]
  %s3 = inlined_call_operand.vmem [shape: f32[1,128], index: 3, kind: input, shape index: {}]
  %s4 = inlined_call_operand.vmem [shape: f32[1,128], index: 4, kind: input, shape index: {}]
  %s5 = inlined_call_operand.vmem [shape: f32[128,128], index: 5, kind: input, shape index: {}]
  %s6 = inlined_call_operand.vmem [shape: f32[1,128], index: 6, kind: input, shape index: {}]
  %s7 = inlined_call_operand.vmem [shape: f32[128,2], index: 7, kind: input, shape index: {}]
  %s8 = inlined_call_operand.vmem [shape: f32[1,2], index: 8, kind: input, shape index: {}]
  %s9 = inlined_call_operand.vmem [shape: f32[8,2], index: 9, kind: output, shape index: {}]
  %s10 = sld [smem:[#allocation0]]
  $region46: #{tpu_custom_call.1} parent=0
    _
  %s12 = ssub.s32 1, %s10
  %s13 = scalar_select 0, %s12, %s10
  // Predicated region
  $region2: #{tpu_custom_call.1} parent=0 // pred_check
    _
  $region3: #{tpu_custom_call.1} parent=0 // pred_check_branch
    %15 = sbr.rel (0) target = $region5
  $region4: #{tpu_custom_call.1} parent=0 // pred_region
    _
  $region5: #{tpu_custom_call.1} parent=0 // pred_fallthru
    _
  // Predicated region
  $region6: #{tpu_custom_call.1} parent=0 // pred_check
    _
  $region7: #{tpu_custom_call.1} parent=0 // pred_check_branch
    %17 = sbr.rel (0) target = $region9
  $region8: #{tpu_custom_call.1} parent=0 // pred_region
    _
  $region9: #{tpu_custom_call.1} parent=0 // pred_fallthru
    _
  // Predicated region
  $region10: #{tpu_custom_call.1} parent=0 // pred_check
    _
  $region11: #{tpu_custom_call.1} parent=0 // pred_check_branch
    %19 = sbr.rel (0) target = $region13
  $region12: #{tpu_custom_call.1} parent=0 // pred_region
    _
  $region13: #{tpu_custom_call.1} parent=0 // pred_fallthru
    _
  // Predicated region
  $region14: #{tpu_custom_call.1} parent=0 // pred_check
    _
  $region15: #{tpu_custom_call.1} parent=0 // pred_check_branch
    %21 = sbr.rel (0) target = $region17
  $region16: #{tpu_custom_call.1} parent=0 // pred_region
    _
  $region17: #{tpu_custom_call.1} parent=0 // pred_fallthru
    _
  // Predicated region
  $region18: #{tpu_custom_call.1} parent=0 // pred_check
    _
  $region19: #{tpu_custom_call.1} parent=0 // pred_check_branch
    %23 = sbr.rel (0) target = $region21
  $region20: #{tpu_custom_call.1} parent=0 // pred_region
    _
  $region21: #{tpu_custom_call.1} parent=0 // pred_fallthru
    _
  // Predicated region
  $region22: #{tpu_custom_call.1} parent=0 // pred_check
    _
  $region23: #{tpu_custom_call.1} parent=0 // pred_check_branch
    %25 = sbr.rel (0) target = $region25
  $region24: #{tpu_custom_call.1} parent=0 // pred_region
    _
  $region25: #{tpu_custom_call.1} parent=0 // pred_fallthru
    _
  // Predicated region
  $region26: #{tpu_custom_call.1} parent=0 // pred_check
    _
  $region27: #{tpu_custom_call.1} parent=0 // pred_check_branch
    %27 = sbr.rel (0) target = $region29
  $region28: #{tpu_custom_call.1} parent=0 // pred_region
    _
  $region29: #{tpu_custom_call.1} parent=0 // pred_fallthru
    _
  // Predicated region
  $region30: #{tpu_custom_call.1} parent=0 // pred_check
    _
  $region31: #{tpu_custom_call.1} parent=0 // pred_check_branch
    %29 = sbr.rel (0) target = $region33
  $region32: #{tpu_custom_call.1} parent=0 // pred_region
    _
  $region33: #{tpu_custom_call.1} parent=0 // pred_fallthru
    _
  // Predicated region
  $region34: #{tpu_custom_call.1} parent=0 // pred_check
    _
  $region35: #{tpu_custom_call.1} parent=0 // pred_check_branch
    %31 = sbr.rel (0) target = $region37
  $region36: #{tpu_custom_call.1} parent=0 // pred_region
    _
  $region37: #{tpu_custom_call.1} parent=0 // pred_fallthru
    _
  %v32 = vld [vmem:[%s0] sm:$0xff]
  %v33 = vld [vmem:[%s1] sm:$0xff]
  %v34 = vld [vmem:[%s2] sm:$0x3]
  %v35 = vld [vmem:[%s3] sm:$0x1]
  %37 = vset.pattern.permute.xlu0 0
  %38 = vperm.xlu0 %37, %v33
  %v39 = vpop.permute.xlu0 %38
  %v42 = vlaneseq
  %v43 = vshrl.u32 %v42, 7
  %v44 = vsub.s32 0, %v43
  %v45 = vrot.slane %v35, %v44
  %v47 = vmul.f32 %v39, %v45
  %vm48 = vcmask 15360
  %v50 = vsel %vm48, %v32, 0
  %vm52 = vcmask 1041408
  %v54 = vsel %vm52, %v34, 0
  %56 = vmatprep.subr.mxu0 0.0
  %57 = vmatpush1.msra.mxu0 %v54
  %58 = vmatprep.subr.mxu0 0.0
  %59 = vmatpush1.msra.mxu0 0.0
  %60 = vmatprep.subr.mxu0 0.0
  %61 = vmatpush1.msra.mxu0 0.0
  %62 = vmatprep.subr.mxu0 0.0
  %63 = vmatpush1.msra.mxu0 0.0
  %64 = vmatprep.subr.mxu0 0.0
  %65 = vmatpush1.msra.mxu0 0.0
  %66 = vmatprep.subr.mxu0 0.0
  %67 = vmatpush1.msra.mxu0 0.0
  %68 = vmatprep.subr.mxu0 0.0
  %69 = vmatpush1.msra.mxu0 0.0
  %70 = vmatprep.subr.mxu0 0.0
  %71 = vmatpush1.msra.mxu0 0.0
  %72 = vmatprep.subr.mxu0 0.0
  %73 = vmatpush1.msra.mxu0 0.0
  %74 = vmatprep.subr.mxu0 0.0
  %75 = vmatpush1.msra.mxu0 0.0
  %76 = vmatprep.subr.mxu0 0.0
  %77 = vmatpush1.msra.mxu0 0.0
  %78 = vmatprep.subr.mxu0 0.0
  %79 = vmatpush1.msra.mxu0 0.0
  %80 = vmatprep.subr.mxu0 0.0
  %81 = vmatpush1.msra.mxu0 0.0
  %82 = vmatprep.subr.mxu0 0.0
  %83 = vmatpush1.msra.mxu0 0.0
  %84 = vmatprep.subr.mxu0 0.0
  %85 = vmatpush1.msra.mxu0 0.0
  %86 = vmatprep.subr.mxu0 0.0
  %87 = vmatpush1.msra.mxu0 0.0
  %88 = vmatprep.subr.mxu0 0.0
  %89 = vmatpush1.msra.mxu0 0.0
  %90 = vmatprep.subr.mxu0 0.0
  %91 = vmatpush1.msra.mxu0 0.0
  %92 = vmatprep.subr.mxu0 0.0
  %93 = vmatpush1.msra.mxu0 0.0
  %94 = vmatprep.subr.mxu0 0.0
  %95 = vmatpush1.msra.mxu0 0.0
  %96 = vmatprep.subr.mxu0 0.0
  %97 = vmatpush1.msra.mxu0 0.0
  %98 = vmatprep.subr.mxu0 0.0
  %99 = vmatpush1.msra.mxu0 0.0
  %100 = vmatprep.subr.mxu0 0.0
  %101 = vmatpush1.msra.mxu0 0.0
  %102 = vmatprep.subr.mxu0 0.0
  %103 = vmatpush1.msra.mxu0 0.0
  %104 = vmatprep.subr.mxu0 0.0
  %105 = vmatpush1.msra.mxu0 0.0
  %106 = vmatprep.subr.mxu0 0.0
  %107 = vmatpush1.msra.mxu0 0.0
  %108 = vmatprep.subr.mxu0 0.0
  %109 = vmatpush1.msra.mxu0 0.0
  %110 = vmatprep.subr.mxu0 0.0
  %111 = vmatpush1.msra.mxu0 0.0
  %112 = vmatprep.subr.mxu0 0.0
  %113 = vmatpush1.msra.mxu0 0.0
  %114 = vmatprep.subr.mxu0 0.0
  %115 = vmatpush1.msra.mxu0 0.0
  %116 = vmatprep.subr.mxu0 0.0
  %117 = vmatpush1.msra.mxu0 0.0
  %118 = vmatprep.subr.mxu0 0.0
  %119 = vmatpush1.msra.mxu0 0.0
  %120 = vmatprep.mubr.f32.mxu0 0.0
  %121 = vmatmul.mubr.f32.gmra.mrb[0].mxu0 %v50
  %v122 = vpop.f32.mrb[0].mxu0
  %v123 = vadd.f32 %v47, %v122
  %v124 = vpop.f32.mrb[0].mxu0
  %125 = vdwg.mxu0
  %v126 = vld [vmem:[%s4] sm:$0x1]
  %v128 = vlaneseq
  %v129 = vshrl.u32 %v128, 7
  %v130 = vsub.s32 0, %v129
  %v131 = vrot.slane %v126, %v130
  %v133 = vadd.f32 %v123, %v131
  %v134 = vmax.f32 %v133, 0.0
  %v135 = vld [vmem:[%s5] sm:$0xff]
  %v136 = vld [vmem:[%s5 + $0x8] sm:$0xff]
  %v137 = vld [vmem:[%s5 + $0x10] sm:$0xff]
  %v138 = vld [vmem:[%s5 + $0x18] sm:$0xff]
  %v139 = vld [vmem:[%s5 + $0x20] sm:$0xff]
  %v140 = vld [vmem:[%s5 + $0x28] sm:$0xff]
  %v141 = vld [vmem:[%s5 + $0x30] sm:$0xff]
  %v142 = vld [vmem:[%s5 + $0x38] sm:$0xff]
  %v143 = vld [vmem:[%s5 + $0x40] sm:$0xff]
  %v144 = vld [vmem:[%s5 + $0x48] sm:$0xff]
  %v145 = vld [vmem:[%s5 + $0x50] sm:$0xff]
  %v146 = vld [vmem:[%s5 + $0x58] sm:$0xff]
  %v147 = vld [vmem:[%s5 + $0x60] sm:$0xff]
  %v148 = vld [vmem:[%s5 + $0x68] sm:$0xff]
  %v149 = vld [vmem:[%s5 + $0x70] sm:$0xff]
  %v150 = vld [vmem:[%s5 + $0x78] sm:$0xff]
  %v151 = vld [vmem:[%s6] sm:$0x1]
  %v153 = vlaneseq
  %v154 = vshrl.u32 %v153, 7
  %v155 = vsub.s32 0, %v154
  %v156 = vrot.slane %v151, %v155
  %158 = vmatprep.subr.mxu0 0.0
  %159 = vmatpush1.msra.mxu0 %v135
  %160 = vmatprep.subr.mxu0 0.0
  %161 = vmatpush1.msra.mxu0 %v136
  %162 = vmatprep.subr.mxu0 0.0
  %163 = vmatpush1.msra.mxu0 %v137
  %164 = vmatprep.subr.mxu0 0.0
  %165 = vmatpush1.msra.mxu0 %v138
  %166 = vmatprep.subr.mxu0 0.0
  %167 = vmatpush1.msra.mxu0 %v139
  %168 = vmatprep.subr.mxu0 0.0
  %169 = vmatpush1.msra.mxu0 %v140
  %170 = vmatprep.subr.mxu0 0.0
  %171 = vmatpush1.msra.mxu0 %v141
  %172 = vmatprep.subr.mxu0 0.0
  %173 = vmatpush1.msra.mxu0 %v142
  %174 = vmatprep.subr.mxu0 0.0
  %175 = vmatpush1.msra.mxu0 %v143
  %176 = vmatprep.subr.mxu0 0.0
  %177 = vmatpush1.msra.mxu0 %v144
  %178 = vmatprep.subr.mxu0 0.0
  %179 = vmatpush1.msra.mxu0 %v145
  %180 = vmatprep.subr.mxu0 0.0
  %181 = vmatpush1.msra.mxu0 %v146
  %182 = vmatprep.subr.mxu0 0.0
  %183 = vmatpush1.msra.mxu0 %v147
  %184 = vmatprep.subr.mxu0 0.0
  %185 = vmatpush1.msra.mxu0 %v148
  %186 = vmatprep.subr.mxu0 0.0
  %187 = vmatpush1.msra.mxu0 %v149
  %188 = vmatprep.subr.mxu0 0.0
  %189 = vmatpush1.msra.mxu0 %v150
  %190 = vmatprep.subr.mxu0 0.0
  %191 = vmatpush1.msra.mxu0 0.0
  %192 = vmatprep.subr.mxu0 0.0
  %193 = vmatpush1.msra.mxu0 0.0
  %194 = vmatprep.subr.mxu0 0.0
  %195 = vmatpush1.msra.mxu0 0.0
  %196 = vmatprep.subr.mxu0 0.0
  %197 = vmatpush1.msra.mxu0 0.0
  %198 = vmatprep.subr.mxu0 0.0
  %199 = vmatpush1.msra.mxu0 0.0
  %200 = vmatprep.subr.mxu0 0.0
  %201 = vmatpush1.msra.mxu0 0.0
  %202 = vmatprep.subr.mxu0 0.0
  %203 = vmatpush1.msra.mxu0 0.0
  %204 = vmatprep.subr.mxu0 0.0
  %205 = vmatpush1.msra.mxu0 0.0
  %206 = vmatprep.subr.mxu0 0.0
  %207 = vmatpush1.msra.mxu0 0.0
  %208 = vmatprep.subr.mxu0 0.0
  %209 = vmatpush1.msra.mxu0 0.0
  %210 = vmatprep.subr.mxu0 0.0
  %211 = vmatpush1.msra.mxu0 0.0
  %212 = vmatprep.subr.mxu0 0.0
  %213 = vmatpush1.msra.mxu0 0.0
  %214 = vmatprep.subr.mxu0 0.0
  %215 = vmatpush1.msra.mxu0 0.0
  %216 = vmatprep.subr.mxu0 0.0
  %217 = vmatpush1.msra.mxu0 0.0
  %218 = vmatprep.subr.mxu0 0.0
  %219 = vmatpush1.msra.mxu0 0.0
  %220 = vmatprep.subr.mxu0 0.0
  %221 = vmatpush1.msra.mxu0 0.0
  %222 = vmatprep.mubr.f32.mxu0 0.0
  %223 = vmatmul.mubr.f32.gmra.mrb[0].mxu0 %v134
  %v224 = vpop.f32.mrb[0].mxu0
  %v225 = vadd.f32 %v156, %v224
  %v226 = vpop.f32.mrb[0].mxu0
  %227 = vdwg.mxu0
  %v228 = vmax.f32 %v225, 0.0
  %v229 = vld [vmem:[%s7] sm:$0xff]
  %v230 = vld [vmem:[%s7 + $0x8] sm:$0xff]
  %v231 = vld [vmem:[%s7 + $0x10] sm:$0xff]
  %v232 = vld [vmem:[%s7 + $0x18] sm:$0xff]
  %v233 = vld [vmem:[%s7 + $0x20] sm:$0xff]
  %v234 = vld [vmem:[%s7 + $0x28] sm:$0xff]
  %v235 = vld [vmem:[%s7 + $0x30] sm:$0xff]
  %v236 = vld [vmem:[%s7 + $0x38] sm:$0xff]
  %v237 = vld [vmem:[%s7 + $0x40] sm:$0xff]
  %v238 = vld [vmem:[%s7 + $0x48] sm:$0xff]
  %v239 = vld [vmem:[%s7 + $0x50] sm:$0xff]
  %v240 = vld [vmem:[%s7 + $0x58] sm:$0xff]
  %v241 = vld [vmem:[%s7 + $0x60] sm:$0xff]
  %v242 = vld [vmem:[%s7 + $0x68] sm:$0xff]
  %v243 = vld [vmem:[%s7 + $0x70] sm:$0xff]
  %v244 = vld [vmem:[%s7 + $0x78] sm:$0xff]
  %v245 = vld [vmem:[%s8] sm:$0x1]
  %v247 = vlaneseq
  %v248 = vshrl.u32 %v247, 7
  %v249 = vsub.s32 0, %v248
  %v250 = vrot.slane %v245, %v249
  %252 = vmatprep.subr.mxu0 0.0
  %253 = vmatpush1.msra.mxu0 %v229
  %254 = vmatprep.subr.mxu0 0.0
  %255 = vmatpush1.msra.mxu0 %v230
  %256 = vmatprep.subr.mxu0 0.0
  %257 = vmatpush1.msra.mxu0 %v231
  %258 = vmatprep.subr.mxu0 0.0
  %259 = vmatpush1.msra.mxu0 %v232
  %260 = vmatprep.subr.mxu0 0.0
  %261 = vmatpush1.msra.mxu0 %v233
  %262 = vmatprep.subr.mxu0 0.0
  %263 = vmatpush1.msra.mxu0 %v234
  %264 = vmatprep.subr.mxu0 0.0
  %265 = vmatpush1.msra.mxu0 %v235
  %266 = vmatprep.subr.mxu0 0.0
  %267 = vmatpush1.msra.mxu0 %v236
  %268 = vmatprep.subr.mxu0 0.0
  %269 = vmatpush1.msra.mxu0 %v237
  %270 = vmatprep.subr.mxu0 0.0
  %271 = vmatpush1.msra.mxu0 %v238
  %272 = vmatprep.subr.mxu0 0.0
  %273 = vmatpush1.msra.mxu0 %v239
  %274 = vmatprep.subr.mxu0 0.0
  %275 = vmatpush1.msra.mxu0 %v240
  %276 = vmatprep.subr.mxu0 0.0
  %277 = vmatpush1.msra.mxu0 %v241
  %278 = vmatprep.subr.mxu0 0.0
  %279 = vmatpush1.msra.mxu0 %v242
  %280 = vmatprep.subr.mxu0 0.0
  %281 = vmatpush1.msra.mxu0 %v243
  %282 = vmatprep.subr.mxu0 0.0
  %283 = vmatpush1.msra.mxu0 %v244
  %284 = vmatprep.subr.mxu0 0.0
  %285 = vmatpush1.msra.mxu0 0.0
  %286 = vmatprep.subr.mxu0 0.0
  %287 = vmatpush1.msra.mxu0 0.0
  %288 = vmatprep.subr.mxu0 0.0
  %289 = vmatpush1.msra.mxu0 0.0
  %290 = vmatprep.subr.mxu0 0.0
  %291 = vmatpush1.msra.mxu0 0.0
  %292 = vmatprep.subr.mxu0 0.0
  %293 = vmatpush1.msra.mxu0 0.0
  %294 = vmatprep.subr.mxu0 0.0
  %295 = vmatpush1.msra.mxu0 0.0
  %296 = vmatprep.subr.mxu0 0.0
  %297 = vmatpush1.msra.mxu0 0.0
  %298 = vmatprep.subr.mxu0 0.0
  %299 = vmatpush1.msra.mxu0 0.0
  %300 = vmatprep.subr.mxu0 0.0
  %301 = vmatpush1.msra.mxu0 0.0
  %302 = vmatprep.subr.mxu0 0.0
  %303 = vmatpush1.msra.mxu0 0.0
  %304 = vmatprep.subr.mxu0 0.0
  %305 = vmatpush1.msra.mxu0 0.0
  %306 = vmatprep.subr.mxu0 0.0
  %307 = vmatpush1.msra.mxu0 0.0
  %308 = vmatprep.subr.mxu0 0.0
  %309 = vmatpush1.msra.mxu0 0.0
  %310 = vmatprep.subr.mxu0 0.0
  %311 = vmatpush1.msra.mxu0 0.0
  %312 = vmatprep.subr.mxu0 0.0
  %313 = vmatpush1.msra.mxu0 0.0
  %314 = vmatprep.subr.mxu0 0.0
  %315 = vmatpush1.msra.mxu0 0.0
  %316 = vmatprep.mubr.f32.mxu0 0.0
  %317 = vmatmul.mubr.f32.gmra.mrb[0].mxu0 %v228
  %v318 = vpop.f32.mrb[0].mxu0
  %v319 = vadd.f32 %v250, %v318
  %v320 = vpop.f32.mrb[0].mxu0
  %321 = vdwg.mxu0
  %322 = vst.msk [vmem:[%s9] sm:$0xff] %vm48, %v319
  // Predicated region
  $region38: #{tpu_custom_call.1} parent=0 // pred_check
    _
  $region39: #{tpu_custom_call.1} parent=0 // pred_check_branch
    %324 = sbr.rel (0) target = $region41
  $region40: #{tpu_custom_call.1} parent=0 // pred_region
    _
  $region41: #{tpu_custom_call.1} parent=0 // pred_fallthru
    _
  // Predicated region
  $region42: #{tpu_custom_call.1} parent=0 // pred_check
    _
  $region43: #{tpu_custom_call.1} parent=0 // pred_check_branch
    %326 = sbr.rel (0) target = $region45
  $region44: #{tpu_custom_call.1} parent=0 // pred_region
    _
  $region45: #{tpu_custom_call.1} parent=0 // pred_fallthru
    _

</llo_original>
